<compile_context>
chip_gen: v6e
topology: v6e:2x2x1
jax: 0.10.0
libtpu: 0.0.40
codegen_flags: <defaults>
</compile_context>

<pallas_src>
import functools

import jax
import jax.numpy as jnp
from jax.experimental import pallas as pl
from jax.experimental.pallas import tpu as pltpu

LANES = 128      # f32/bf16 lane width of a vreg
SUBLANES = 8     # f32 sublane count of a vreg


def _round_up(n, m):
    return ((n + m - 1) // m) * m


def mlp_kernel(x_ref, w_ref, b_ref, o_ref):
    # Single fused affine map: y = x @ W_eff + b_eff
    # x/w are bf16 tiles, MXU accumulates in f32; bias add runs in f32 on the VPU.
    acc = jnp.dot(x_ref[...], w_ref[...], preferred_element_type=jnp.float32)
    o_ref[...] = (acc + b_ref[...]).astype(o_ref.dtype)


@functools.partial(jax.jit, static_argnums=(2,))
def mlp_forward(x, params, image_size):
    """x: (B, image_size, image_size) float32 -> logits (B, num_classes) float32."""
    (w1, b1), (w2, b2), (w3, b3), (w4, b4) = params
    B = x.shape[0]
    K = image_size * image_size
    num_classes = w4.shape[1]

    x2d = jnp.reshape(x, (B, K)).astype(jnp.float32)

    # Collapse the 4 activation-free Linear layers into one affine map (f32).
    w_eff = w1 @ w2 @ w3 @ w4                                  # (K, num_classes)
    b_eff = ((b1 @ w2 + b2) @ w3 + b3) @ w4 + b4               # (num_classes,)

    # Lane/sublane-friendly padded shapes.
    K_pad = _round_up(K, LANES)                # contraction dim, multiple of 128
    N_pad = _round_up(num_classes, LANES)      # lane-dense output (unmasked vst)
    TM = min(512, _round_up(B, SUBLANES))      # rows per grid step (>= 8 sublanes)
    B_pad = _round_up(B, TM)

    # Pad + cast matmul operands to bf16 (MXU-native); bias stays f32.
    x_p = jnp.zeros((B_pad, K_pad), jnp.bfloat16).at[:B, :K].set(
        x2d.astype(jnp.bfloat16))
    w_p = jnp.zeros((K_pad, N_pad), jnp.bfloat16).at[:K, :num_classes].set(
        w_eff.astype(jnp.bfloat16))
    b_p = jnp.zeros((1, N_pad), jnp.float32).at[0, :num_classes].set(b_eff)

    grid = (B_pad // TM,)

    cost = pl.CostEstimate(
        flops=2 * B_pad * K_pad * N_pad,
        transcendentals=0,
        bytes_accessed=(B_pad * K_pad * 2      # x (bf16)
                        + K_pad * N_pad * 2    # W_eff (bf16)
                        + N_pad * 4            # b_eff (f32)
                        + B_pad * N_pad * 4),  # out (f32)
    )

    out_padded = pl.pallas_call(
        mlp_kernel,
        out_shape=jax.ShapeDtypeStruct((B_pad, N_pad), jnp.float32),
        grid_spec=pltpu.PrefetchScalarGridSpec(
            num_scalar_prefetch=0,
            grid=grid,
            in_specs=[
                # Activation tile: new block each grid step (double-buffered).
                pl.BlockSpec((TM, K_pad), lambda i: (i, 0)),
                # Weights / bias: same block every step -> stay VMEM-resident.
                pl.BlockSpec((K_pad, N_pad), lambda i: (0, 0)),
                pl.BlockSpec((1, N_pad), lambda i: (0, 0)),
            ],
            out_specs=pl.BlockSpec((TM, N_pad), lambda i: (i, 0)),
        ),
        compiler_params=pltpu.CompilerParams(
            dimension_semantics=("parallel",),   # 2 TCs on v7x; no-op on v5e/v6e
        ),
        cost_estimate=cost,
    )(x_p, w_p, b_p)

    return out_padded[:B, :num_classes]


def init_linear(key, in_features, out_features):
    """Mimics nn.Linear default init uniform(-1/sqrt(in), 1/sqrt(in)).
    Weight returned already transposed to (in, out) so y = x @ W + b."""
    kw, kb = jax.random.split(key)
    bound = 1.0 / jnp.sqrt(jnp.float32(in_features))
    w = jax.random.uniform(kw, (in_features, out_features), jnp.float32, -bound, bound)
    b = jax.random.uniform(kb, (out_features,), jnp.float32, -bound, bound)
    return w, b


if __name__ == "__main__":
    # Small shapes consistent with the module.
    batch_size = 2
    image_size = 16          # flattened feature dim = 256
    hidden_size = 32
    num_classes = 10

    key = jax.random.PRNGKey(0)
    kx, k1, k2, k3, k4 = jax.random.split(key, 5)

    x = jax.random.normal(kx, (batch_size, image_size, image_size), jnp.float32)

    params = (
        init_linear(k1, image_size * image_size, hidden_size),
        init_linear(k2, hidden_size, hidden_size),
        init_linear(k3, hidden_size, hidden_size),
        init_linear(k4, hidden_size, num_classes),
    )

    out = mlp_forward(x, params, image_size)
    jax.block_until_ready(out)

    # Pure-JAX f32 reference of the original layer-by-layer forward pass.
    x2d = jnp.reshape(x, (batch_size, image_size * image_size))
    ref = x2d
    for w, b in params:
        ref = ref @ w + b

    assert out.shape == (batch_size, num_classes)
    # bf16 MXU inputs + affine collapse -> loosened tolerance (per review).
    assert jnp.allclose(out, ref, atol=2e-2, rtol=2e-2), (
        f"max abs diff {jnp.max(jnp.abs(out - ref))}")

    print("KERNEL_OK")
</pallas_src>

<mosaic_0001>
module attributes {stable_mosaic.version = 11 : i64} {
  func.func @mlp_kernel(%arg0: i32, %arg1: memref<8x256xbf16, #tpu.memory_space<vmem>>, %arg2: memref<256x128xbf16, #tpu.memory_space<vmem>>, %arg3: memref<1x128xf32, #tpu.memory_space<vmem>>, %arg4: memref<8x128xf32, #tpu.memory_space<vmem>>) attributes {dimension_semantics = [#tpu.dimension_semantics<parallel>], iteration_bounds = array<i64: 1>, scalar_prefetch = 0 : i64, scratch_operands = 0 : i64, tpu.core_type = #tpu.core_type<tc>, window_params = [{transform_indices = @transform_0, window_bounds = array<i64: 8, 256>}, {pipeline_mode = #tpu.pipeline_mode<synchronous>, transform_indices = @transform_1, window_bounds = array<i64: 256, 128>}, {pipeline_mode = #tpu.pipeline_mode<synchronous>, transform_indices = @transform_2, window_bounds = array<i64: 1, 128>}, {transform_indices = @transform_3, window_bounds = array<i64: 8, 128>}]} {
    %c0 = arith.constant 0 : index
    %c0_0 = arith.constant 0 : index
    %0 = vector.load %arg1[%c0, %c0_0] : memref<8x256xbf16, #tpu.memory_space<vmem>>, vector<8x256xbf16>
    %c0_1 = arith.constant 0 : index
    %c0_2 = arith.constant 0 : index
    %1 = vector.load %arg2[%c0_1, %c0_2] : memref<256x128xbf16, #tpu.memory_space<vmem>>, vector<256x128xbf16>
    %cst = arith.constant dense<0.000000e+00> : vector<8x128xf32>
    %2 = tpu.matmul %0, %1, %cst {dimension_numbers = #tpu.dot_dimension_numbers<[1], [0], [0], [1], [0, 0, 1, 1], [], []>} : vector<8x256xbf16>, vector<256x128xbf16>, vector<8x128xf32> -> vector<8x128xf32>
    %c0_3 = arith.constant 0 : index
    %c0_4 = arith.constant 0 : index
    %3 = vector.load %arg3[%c0_3, %c0_4] : memref<1x128xf32, #tpu.memory_space<vmem>>, vector<1x128xf32>
    %4 = vector.broadcast %3 : vector<1x128xf32> to vector<8x128xf32>
    %5 = arith.addf %2, %4 : vector<8x128xf32>
    %c0_5 = arith.constant 0 : index
    %c0_6 = arith.constant 0 : index
    %6 = vector.load %arg4[%c0_5, %c0_6] : memref<8x128xf32, #tpu.memory_space<vmem>>, vector<8x128xf32>
    tpu.vector_store %arg4[%c0_5, %c0_6], %5 {strides = array<i32>} : memref<8x128xf32, #tpu.memory_space<vmem>>, vector<8x128xf32>,
    return
  }
  func.func @transform_0(%arg0: i32) -> (i32, i32) {
    %c0_i32 = arith.constant 0 : i32
    %c0_i32_0 = arith.constant 0 : i32
    return %arg0, %c0_i32 : i32, i32
  }
  func.func @transform_1(%arg0: i32) -> (i32, i32) {
    %c0_i32 = arith.constant 0 : i32
    %c0_i32_0 = arith.constant 0 : i32
    %c0_i32_1 = arith.constant 0 : i32
    return %c0_i32, %c0_i32_0 : i32, i32
  }
  func.func @transform_2(%arg0: i32) -> (i32, i32) {
    %c0_i32 = arith.constant 0 : i32
    %c0_i32_0 = arith.constant 0 : i32
    %c0_i32_1 = arith.constant 0 : i32
    return %c0_i32, %c0_i32_0 : i32, i32
  }
  func.func @transform_3(%arg0: i32) -> (i32, i32) {
    %c0_i32 = arith.constant 0 : i32
    %c0_i32_0 = arith.constant 0 : i32
    return %arg0, %c0_i32 : i32, i32
  }
}

</mosaic_0001>

<llo_original>
// kernel: mlp_forward.1
$region0: #{mlp_forward.1}
  #allocation0 [shape = 'u32[]', space=smem, size = 0x4, offset = 0x4, fixed_abs, tag = 'smem constant byte address 0x4 - core index']
  #allocation1 [shape = 'u32[144,128]{1,0:T(1,128)}', space=vmem, size = 0x12000, scoped, tag = 'internal scratch']
  %s0 = inlined_call_operand.vmem [shape: bf16[8,256], index: 0, kind: input, shape index: {}]
  %s1 = inlined_call_operand.vmem [shape: bf16[256,128], index: 1, kind: input, shape index: {}]
  %s2 = inlined_call_operand.vmem [shape: f32[1,128], index: 2, kind: input, shape index: {}]
  %s3 = inlined_call_operand.vmem [shape: f32[8,128], index: 3, kind: output, shape index: {}]
  %s4 = sld [smem:[#allocation0]]
  $region22: #{mlp_forward.1} parent=0
    _
  %s6 = ssub.s32 1, %s4
  %s7 = scalar_select 0, %s6, %s4
  // Predicated region
  $region2: #{mlp_forward.1} parent=0 // pred_check
    _
  $region3: #{mlp_forward.1} parent=0 // pred_check_branch
    %9 = sbr.rel (0) target = $region5
  $region4: #{mlp_forward.1} parent=0 // pred_region
    _
  $region5: #{mlp_forward.1} parent=0 // pred_fallthru
    _
  // Predicated region
  $region6: #{mlp_forward.1} parent=0 // pred_check
    _
  $region7: #{mlp_forward.1} parent=0 // pred_check_branch
    %11 = sbr.rel (0) target = $region9
  $region8: #{mlp_forward.1} parent=0 // pred_region
    _
  $region9: #{mlp_forward.1} parent=0 // pred_fallthru
    _
  // Predicated region
  $region10: #{mlp_forward.1} parent=0 // pred_check
    _
  $region11: #{mlp_forward.1} parent=0 // pred_check_branch
    %13 = sbr.rel (0) target = $region13
  $region12: #{mlp_forward.1} parent=0 // pred_region
    _
  $region13: #{mlp_forward.1} parent=0 // pred_fallthru
    _
  %v15 = vld [vmem:[%s0] sm:$0xff]
  %v16 = vld [vmem:[%s1] sm:$0xf]
  %v17 = vld [vmem:[%s1 + $0x4] sm:$0xf]
  %v18 = vld [vmem:[%s1 + $0x8] sm:$0xf]
  %v19 = vld [vmem:[%s1 + $0xc] sm:$0xf]
  %v20 = vld [vmem:[%s1 + $0x10] sm:$0xf]
  %v21 = vld [vmem:[%s1 + $0x14] sm:$0xf]
  %v22 = vld [vmem:[%s1 + $0x18] sm:$0xf]
  %v23 = vld [vmem:[%s1 + $0x1c] sm:$0xf]
  %v24 = vld [vmem:[%s1 + $0x20] sm:$0xf]
  %v25 = vld [vmem:[%s1 + $0x24] sm:$0xf]
  %v26 = vld [vmem:[%s1 + $0x28] sm:$0xf]
  %v27 = vld [vmem:[%s1 + $0x2c] sm:$0xf]
  %v28 = vld [vmem:[%s1 + $0x30] sm:$0xf]
  %v29 = vld [vmem:[%s1 + $0x34] sm:$0xf]
  %v30 = vld [vmem:[%s1 + $0x38] sm:$0xf]
  %v31 = vld [vmem:[%s1 + $0x3c] sm:$0xf]
  %v32 = vld [vmem:[%s1 + $0x40] sm:$0xf]
  %v33 = vld [vmem:[%s1 + $0x44] sm:$0xf]
  %v34 = vld [vmem:[%s1 + $0x48] sm:$0xf]
  %v35 = vld [vmem:[%s1 + $0x4c] sm:$0xf]
  %v36 = vld [vmem:[%s1 + $0x50] sm:$0xf]
  %v37 = vld [vmem:[%s1 + $0x54] sm:$0xf]
  %v38 = vld [vmem:[%s1 + $0x58] sm:$0xf]
  %v39 = vld [vmem:[%s1 + $0x5c] sm:$0xf]
  %v40 = vld [vmem:[%s1 + $0x60] sm:$0xf]
  %v41 = vld [vmem:[%s1 + $0x64] sm:$0xf]
  %v42 = vld [vmem:[%s1 + $0x68] sm:$0xf]
  %v43 = vld [vmem:[%s1 + $0x6c] sm:$0xf]
  %v44 = vld [vmem:[%s1 + $0x70] sm:$0xf]
  %v45 = vld [vmem:[%s1 + $0x74] sm:$0xf]
  %v46 = vld [vmem:[%s1 + $0x78] sm:$0xf]
  %v47 = vld [vmem:[%s1 + $0x7c] sm:$0xf]
  %v48 = vld [vmem:[%s2] sm:$0x1]
  %v50 = vlaneseq
  %v51 = vshrl.u32 %v50, 7
  %v52 = vsub.s32 0, %v51
  %v53 = vrot.slane %v48, %v52
  %v56 = vunpack.c.l.b16 %v15
  %v57 = vunpack.c.h.b16 %v15
  %v58 = vpack.c.b16 %v56, %v56
  %v59 = vpack.c.b16 %v57, %v57
  %v94 = vunpack.c.l.b16 %v16
  %v95 = vunpack.c.l.b16 %v17
  %v96 = vunpack.c.l.b16 %v18
  %v97 = vunpack.c.l.b16 %v19
  %v98 = vunpack.c.l.b16 %v20
  %v99 = vunpack.c.l.b16 %v21
  %v100 = vunpack.c.l.b16 %v22
  %v101 = vunpack.c.l.b16 %v23
  %v102 = vunpack.c.l.b16 %v24
  %v103 = vunpack.c.l.b16 %v25
  %v104 = vunpack.c.l.b16 %v26
  %v105 = vunpack.c.l.b16 %v27
  %v106 = vunpack.c.l.b16 %v28
  %v107 = vunpack.c.l.b16 %v29
  %v108 = vunpack.c.l.b16 %v30
  %v109 = vunpack.c.l.b16 %v31
  %v110 = vunpack.c.l.b16 %v32
  %v111 = vunpack.c.l.b16 %v33
  %v112 = vunpack.c.l.b16 %v34
  %v113 = vunpack.c.l.b16 %v35
  %v114 = vunpack.c.l.b16 %v36
  %v115 = vunpack.c.l.b16 %v37
  %v116 = vunpack.c.l.b16 %v38
  %v117 = vunpack.c.l.b16 %v39
  %v118 = vunpack.c.l.b16 %v40
  %v119 = vunpack.c.l.b16 %v41
  %v120 = vunpack.c.l.b16 %v42
  %v121 = vunpack.c.l.b16 %v43
  %v122 = vunpack.c.l.b16 %v44
  %v123 = vunpack.c.l.b16 %v45
  %v124 = vunpack.c.l.b16 %v46
  %v125 = vunpack.c.l.b16 %v47
  %v126 = vpack.c.b16 %v95, %v94
  %v127 = vpack.c.b16 %v97, %v96
  %v128 = vpack.c.b16 %v99, %v98
  %v129 = vpack.c.b16 %v101, %v100
  %v130 = vpack.c.b16 %v103, %v102
  %v131 = vpack.c.b16 %v105, %v104
  %v132 = vpack.c.b16 %v107, %v106
  %v133 = vpack.c.b16 %v109, %v108
  %v134 = vpack.c.b16 %v111, %v110
  %v135 = vpack.c.b16 %v113, %v112
  %v136 = vpack.c.b16 %v115, %v114
  %v137 = vpack.c.b16 %v117, %v116
  %v138 = vpack.c.b16 %v119, %v118
  %v139 = vpack.c.b16 %v121, %v120
  %v140 = vpack.c.b16 %v123, %v122
  %v141 = vpack.c.b16 %v125, %v124
  %158 = vmatprep.subr.bf16.mxu0 0
  %159 = vmatpush1.bf16.msra.mxu0 %v133
  %160 = vmatprep.subr.bf16.mxu0 0
  %161 = vmatpush1.bf16.msra.mxu0 %v132
  %162 = vmatprep.subr.bf16.mxu0 0
  %163 = vmatpush1.bf16.msra.mxu0 %v131
  %164 = vmatprep.subr.bf16.mxu0 0
  %165 = vmatpush1.bf16.msra.mxu0 %v130
  %166 = vmatprep.subr.bf16.mxu0 0
  %167 = vmatpush1.bf16.msra.mxu0 %v129
  %168 = vmatprep.subr.bf16.mxu0 0
  %169 = vmatpush1.bf16.msra.mxu0 %v128
  %170 = vmatprep.subr.bf16.mxu0 0
  %171 = vmatpush1.bf16.msra.mxu0 %v127
  %172 = vmatprep.subr.bf16.mxu0 0
  %173 = vmatpush1.bf16.msra.mxu0 %v126
  %174 = vmatprep.subr.bf16.mxu0 0
  %175 = vmatpush2.bf16.msra.mxu0 %v141
  %176 = vmatprep.subr.bf16.mxu0 0
  %177 = vmatpush2.bf16.msra.mxu0 %v140
  %178 = vmatprep.subr.bf16.mxu0 0
  %179 = vmatpush2.bf16.msra.mxu0 %v139
  %180 = vmatprep.subr.bf16.mxu0 0
  %181 = vmatpush2.bf16.msra.mxu0 %v138
  %182 = vmatprep.subr.bf16.mxu0 0
  %183 = vmatpush2.bf16.msra.mxu0 %v137
  %184 = vmatprep.subr.bf16.mxu0 0
  %185 = vmatpush2.bf16.msra.mxu0 %v136
  %186 = vmatprep.subr.bf16.mxu0 0
  %187 = vmatpush2.bf16.msra.mxu0 %v135
  %188 = vmatprep.subr.bf16.mxu0 0
  %189 = vmatpush2.bf16.msra.mxu0 %v134
  %190 = vmatprep.mubr.bf16.mxu0 %v59
  %191 = vmatmul.mubr.bf16.gmra.mxu0 %v58
  %v192 = vpop.f32.mrf.mxu0
  %v193 = vadd.f32 %v53, %v192
  %v194 = vpop.f32.mrf.mxu0
  %v195 = vpop.f32.mrf.mxu0
  %v196 = vpop.f32.mrf.mxu0
  %197 = vdwg.mxu0
  %198 = vst [vmem:[%s3] sm:$0xff] %v193
  // Predicated region
  $region14: #{mlp_forward.1} parent=0 // pred_check
    _
  $region15: #{mlp_forward.1} parent=0 // pred_check_branch
    %200 = sbr.rel (0) target = $region17
  $region16: #{mlp_forward.1} parent=0 // pred_region
    _
  $region17: #{mlp_forward.1} parent=0 // pred_fallthru
    _
  // Predicated region
  $region18: #{mlp_forward.1} parent=0 // pred_check
    _
  $region19: #{mlp_forward.1} parent=0 // pred_check_branch
    %202 = sbr.rel (0) target = $region21
  $region20: #{mlp_forward.1} parent=0 // pred_region
    _
  $region21: #{mlp_forward.1} parent=0 // pred_fallthru
    _

</llo_original>
